<compile_context>
chip_gen: v7x
topology: tpu7x:2x2x1
jax: 0.10.0
libtpu: 0.0.40
codegen_flags: <defaults>
</compile_context>

<pallas_src>
import jax
import jax.numpy as jnp
from jax.experimental import pallas as pl
from jax.experimental.pallas import tpu as pltpu


def _round_up(x, m):
    return ((x + m - 1) // m) * m


def _make_sobel_kernel(bb, Hp, Wp):
    def kernel(x_ref, o_ref):
        # Static unrolled loop over the images packed into this grid step:
        # every op below is a full (Hp, Wp) unmasked vreg op.
        for i in range(bb):
            x = x_ref[i]                                # (Hp, Wp) f32, lane-dense
            # Horizontal 3-tap passes via circular lane rotation (XLU slot).
            xl = pltpu.roll(x, shift=1, axis=1)         # column j-1
            xr = pltpu.roll(x, shift=Wp - 1, axis=1)    # column j+1
            dx = xr - xl                                # row taps [-1, 0, 1]
            sm = xl + 2.0 * x + xr                      # row taps [ 1, 2, 1]
            # Vertical 3-tap passes via circular sublane rotation.
            gx = pltpu.roll(dx, shift=1, axis=0) + 2.0 * dx \
                + pltpu.roll(dx, shift=Hp - 1, axis=0)  # col taps [1, 2, 1]
            gy = pltpu.roll(sm, shift=1, axis=0) \
                - pltpu.roll(sm, shift=Hp - 1, axis=0)  # col taps [1, 0, -1]
            o_ref[i] = jnp.abs(gx) + jnp.abs(gy)
    return kernel


def sobelxy(x):
    """x: (N, 1, H, W) float array -> (N, 1, H, W) |sobel_x| + |sobel_y|."""
    B, C, H, W = x.shape
    assert C == 1, "Sobel weights in the reference module are (1,1,3,3): C must be 1"

    Hp = _round_up(H + 2, 8)        # sublane-aligned padded height (+1 halo each side)
    Wp = _round_up(W + 2, 128)      # lane-aligned padded width    (+1 halo each side)

    # Pack several images into one grid step (amortize per-step overhead),
    # bounded by a conservative VMEM budget per block.
    img_bytes = Hp * Wp * 4
    bb = int(max(1, min(B, 16, (2 << 20) // img_bytes)))
    Bp = _round_up(B, bb)

    # Zero pad: halo of 1 (acts as conv padding=1) + alignment padding.
    xp = jnp.pad(x[:, 0].astype(jnp.float32),
                 ((0, Bp - B), (1, Hp - H - 1), (1, Wp - W - 1)))

    # Double-buffered input + output blocks, plus headroom.
    block_bytes = bb * img_bytes
    vmem_limit = int(min(128 << 20, max(16 << 20, 4 * block_bytes + (4 << 20))))

    spec = pl.BlockSpec((bb, Hp, Wp), lambda g: (g, 0, 0))
    out = pl.pallas_call(
        _make_sobel_kernel(bb, Hp, Wp),
        out_shape=jax.ShapeDtypeStruct((Bp, Hp, Wp), jnp.float32),
        grid=(Bp // bb,),
        in_specs=[spec],
        out_specs=spec,
        compiler_params=pltpu.CompilerParams(
            dimension_semantics=("parallel",),
            vmem_limit_bytes=vmem_limit),
    )(xp)

    # Strip alignment/halo padding and restore NCHW.
    return out[:B, 1:1 + H, 1:1 + W][:, None, :, :].astype(x.dtype)


def _sobel_ref(x):
    """Pure-JAX reference identical to the PyTorch module's forward."""
    kx = jnp.array([[-1., 0., 1.], [-2., 0., 2.], [-1., 0., 1.]], jnp.float32)
    ky = jnp.array([[1., 2., 1.], [0., 0., 0.], [-1., -2., -1.]], jnp.float32)

    def conv(img, k):
        return jax.lax.conv_general_dilated(
            img.astype(jnp.float32), k[None, None], (1, 1), ((1, 1), (1, 1)),
            dimension_numbers=("NCHW", "OIHW", "NCHW"))

    return jnp.abs(conv(x, kx)) + jnp.abs(conv(x, ky))


if __name__ == "__main__":
    key = jax.random.PRNGKey(0)
    x = jax.random.uniform(key, (2, 1, 16, 16), dtype=jnp.float32)

    out = jax.jit(sobelxy)(x)
    jax.block_until_ready(out)

    ref = _sobel_ref(x)
    err = float(jnp.max(jnp.abs(out - ref)))
    assert err < 1e-3, f"mismatch vs conv2d reference: max abs err = {err}"

    print("KERNEL_OK")
</pallas_src>

<mosaic_0001>
module attributes {stable_mosaic.version = 11 : i64} {
  func.func @kernel(%arg0: i32, %arg1: memref<2x24x128xf32, #tpu.memory_space<vmem>>, %arg2: memref<2x24x128xf32, #tpu.memory_space<vmem>>) attributes {dimension_semantics = [#tpu.dimension_semantics<parallel>], iteration_bounds = array<i64: 1>, scalar_prefetch = 0 : i64, scratch_operands = 0 : i64, tpu.core_type = #tpu.core_type<tc>, window_params = [{transform_indices = @transform_0, window_bounds = array<i64: 2, 24, 128>}, {transform_indices = @transform_1, window_bounds = array<i64: 2, 24, 128>}]} {
    %c0 = arith.constant 0 : index
    %c0_0 = arith.constant 0 : index
    %c0_1 = arith.constant 0 : index
    %0 = vector.load %arg1[%c0, %c0_0, %c0_1] : memref<2x24x128xf32, #tpu.memory_space<vmem>>, vector<1x24x128xf32>
    %1 = vector.shape_cast %0 : vector<1x24x128xf32> to vector<24x128xf32>
    %c1_i32 = arith.constant 1 : i32
    %2 = tpu.dynamic_rotate %1 by %c1_i32 dim 1 : vector<24x128xf32>, i32 -> vector<24x128xf32>
    %c127_i32 = arith.constant 127 : i32
    %3 = tpu.dynamic_rotate %1 by %c127_i32 dim 1 : vector<24x128xf32>, i32 -> vector<24x128xf32>
    %4 = arith.subf %3, %2 : vector<24x128xf32>
    %cst = arith.constant 2.000000e+00 : f32
    %5 = vector.broadcast %cst : f32 to vector<24x128xf32>
    %6 = arith.mulf %5, %1 : vector<24x128xf32>
    %7 = arith.addf %2, %6 : vector<24x128xf32>
    %8 = arith.addf %7, %3 : vector<24x128xf32>
    %c1_i32_2 = arith.constant 1 : i32
    %9 = tpu.dynamic_rotate %4 by %c1_i32_2 dim 0 : vector<24x128xf32>, i32 -> vector<24x128xf32>
    %cst_3 = arith.constant 2.000000e+00 : f32
    %10 = vector.broadcast %cst_3 : f32 to vector<24x128xf32>
    %11 = arith.mulf %10, %4 : vector<24x128xf32>
    %12 = arith.addf %9, %11 : vector<24x128xf32>
    %c23_i32 = arith.constant 23 : i32
    %13 = tpu.dynamic_rotate %4 by %c23_i32 dim 0 : vector<24x128xf32>, i32 -> vector<24x128xf32>
    %14 = arith.addf %12, %13 : vector<24x128xf32>
    %c1_i32_4 = arith.constant 1 : i32
    %15 = tpu.dynamic_rotate %8 by %c1_i32_4 dim 0 : vector<24x128xf32>, i32 -> vector<24x128xf32>
    %c23_i32_5 = arith.constant 23 : i32
    %16 = tpu.dynamic_rotate %8 by %c23_i32_5 dim 0 : vector<24x128xf32>, i32 -> vector<24x128xf32>
    %17 = arith.subf %15, %16 : vector<24x128xf32>
    %18 = math.absf %14 : vector<24x128xf32>
    %19 = math.absf %17 : vector<24x128xf32>
    %20 = arith.addf %18, %19 : vector<24x128xf32>
    %c0_6 = arith.constant 0 : index
    %c0_7 = arith.constant 0 : index
    %c0_8 = arith.constant 0 : index
    %21 = vector.load %arg2[%c0_6, %c0_7, %c0_8] : memref<2x24x128xf32, #tpu.memory_space<vmem>>, vector<1x24x128xf32>
    %22 = vector.shape_cast %21 : vector<1x24x128xf32> to vector<24x128xf32>
    %23 = vector.shape_cast %20 : vector<24x128xf32> to vector<1x24x128xf32>
    tpu.vector_store %arg2[%c0_6, %c0_7, %c0_8], %23 {strides = array<i32>} : memref<2x24x128xf32, #tpu.memory_space<vmem>>, vector<1x24x128xf32>,
    %c1 = arith.constant 1 : index
    %c0_9 = arith.constant 0 : index
    %c0_10 = arith.constant 0 : index
    %24 = vector.load %arg1[%c1, %c0_9, %c0_10] : memref<2x24x128xf32, #tpu.memory_space<vmem>>, vector<1x24x128xf32>
    %25 = vector.shape_cast %24 : vector<1x24x128xf32> to vector<24x128xf32>
    %c1_i32_11 = arith.constant 1 : i32
    %26 = tpu.dynamic_rotate %25 by %c1_i32_11 dim 1 : vector<24x128xf32>, i32 -> vector<24x128xf32>
    %c127_i32_12 = arith.constant 127 : i32
    %27 = tpu.dynamic_rotate %25 by %c127_i32_12 dim 1 : vector<24x128xf32>, i32 -> vector<24x128xf32>
    %28 = arith.subf %27, %26 : vector<24x128xf32>
    %cst_13 = arith.constant 2.000000e+00 : f32
    %29 = vector.broadcast %cst_13 : f32 to vector<24x128xf32>
    %30 = arith.mulf %29, %25 : vector<24x128xf32>
    %31 = arith.addf %26, %30 : vector<24x128xf32>
    %32 = arith.addf %31, %27 : vector<24x128xf32>
    %c1_i32_14 = arith.constant 1 : i32
    %33 = tpu.dynamic_rotate %28 by %c1_i32_14 dim 0 : vector<24x128xf32>, i32 -> vector<24x128xf32>
    %cst_15 = arith.constant 2.000000e+00 : f32
    %34 = vector.broadcast %cst_15 : f32 to vector<24x128xf32>
    %35 = arith.mulf %34, %28 : vector<24x128xf32>
    %36 = arith.addf %33, %35 : vector<24x128xf32>
    %c23_i32_16 = arith.constant 23 : i32
    %37 = tpu.dynamic_rotate %28 by %c23_i32_16 dim 0 : vector<24x128xf32>, i32 -> vector<24x128xf32>
    %38 = arith.addf %36, %37 : vector<24x128xf32>
    %c1_i32_17 = arith.constant 1 : i32
    %39 = tpu.dynamic_rotate %32 by %c1_i32_17 dim 0 : vector<24x128xf32>, i32 -> vector<24x128xf32>
    %c23_i32_18 = arith.constant 23 : i32
    %40 = tpu.dynamic_rotate %32 by %c23_i32_18 dim 0 : vector<24x128xf32>, i32 -> vector<24x128xf32>
    %41 = arith.subf %39, %40 : vector<24x128xf32>
    %42 = math.absf %38 : vector<24x128xf32>
    %43 = math.absf %41 : vector<24x128xf32>
    %44 = arith.addf %42, %43 : vector<24x128xf32>
    %c1_19 = arith.constant 1 : index
    %c0_20 = arith.constant 0 : index
    %c0_21 = arith.constant 0 : index
    %45 = vector.load %arg2[%c1_19, %c0_20, %c0_21] : memref<2x24x128xf32, #tpu.memory_space<vmem>>, vector<1x24x128xf32>
    %46 = vector.shape_cast %45 : vector<1x24x128xf32> to vector<24x128xf32>
    %47 = vector.shape_cast %44 : vector<24x128xf32> to vector<1x24x128xf32>
    tpu.vector_store %arg2[%c1_19, %c0_20, %c0_21], %47 {strides = array<i32>} : memref<2x24x128xf32, #tpu.memory_space<vmem>>, vector<1x24x128xf32>,
    return
  }
  func.func @transform_0(%arg0: i32) -> (i32, i32, i32) {
    %c0_i32 = arith.constant 0 : i32
    %c0_i32_0 = arith.constant 0 : i32
    %c0_i32_1 = arith.constant 0 : i32
    return %arg0, %c0_i32, %c0_i32_0 : i32, i32, i32
  }
  func.func @transform_1(%arg0: i32) -> (i32, i32, i32) {
    %c0_i32 = arith.constant 0 : i32
    %c0_i32_0 = arith.constant 0 : i32
    %c0_i32_1 = arith.constant 0 : i32
    return %arg0, %c0_i32, %c0_i32_0 : i32, i32, i32
  }
}

</mosaic_0001>

<llo_original>
// kernel: sobelxy.1
$region0: #{sobelxy.1}
  #allocation0 [shape = 'u32[]', space=smem, size = 0x4, offset = 0x4, fixed_abs, tag = 'smem constant byte address 0x4 - core index']
  #allocation1 [shape = 'u32[144,128]{1,0:T(1,128)}', space=vmem, size = 0x12000, scoped, tag = 'internal scratch']
  %s0 = inlined_call_operand.vmem [shape: f32[2,24,128], index: 0, kind: input, shape index: {}]
  %s1 = inlined_call_operand.vmem [shape: f32[2,24,128], index: 1, kind: output, shape index: {}]
  %s2 = sld [smem:[#allocation0]]
  $region14: #{sobelxy.1} parent=0
    _
  %s4 = ssub.s32 1, %s2
  %s5 = scalar_select 0, %s4, %s2
  // Predicated region
  $region2: #{sobelxy.1} parent=0 // pred_check
    _
  $region3: #{sobelxy.1} parent=0 // pred_check_branch
    %7 = sbr.rel (0) target = $region5
  $region4: #{sobelxy.1} parent=0 // pred_region
    _
  $region5: #{sobelxy.1} parent=0 // pred_fallthru
    _
  %v8 = vld [vmem:[%s0] sm:$0xff]
  %v9 = vld [vmem:[%s0 + $0x8] sm:$0xff]
  %v10 = vld [vmem:[%s0 + $0x10] sm:$0xff]
  %11 = vrot.lane.b32.xlu0 %v8, 1
  %v12 = vpop.permute.xlu0 %11
  %13 = vrot.lane.b32.xlu0 %v9, 1
  %v14 = vpop.permute.xlu0 %13
  %15 = vrot.lane.b32.xlu0 %v10, 1
  %v16 = vpop.permute.xlu0 %15
  %17 = vrot.lane.b32.xlu0 %v8, 127
  %v18 = vpop.permute.xlu0 %17
  %19 = vrot.lane.b32.xlu0 %v9, 127
  %v20 = vpop.permute.xlu0 %19
  %21 = vrot.lane.b32.xlu0 %v10, 127
  %v22 = vpop.permute.xlu0 %21
  %v23 = vsub.f32 %v18, %v12
  %v24 = vsub.f32 %v20, %v14
  %v25 = vsub.f32 %v22, %v16
  %v26 = vmul.f32 %v8, 2.0
  %v27 = vmul.f32 %v9, 2.0
  %v28 = vmul.f32 %v10, 2.0
  %v29 = vadd.f32 %v12, %v26
  %v30 = vadd.f32 %v14, %v27
  %v31 = vadd.f32 %v16, %v28
  %v32 = vadd.f32 %v29, %v18
  %v33 = vadd.f32 %v30, %v20
  %v34 = vadd.f32 %v31, %v22
  %v35 = vrot.slane %v23, 7
  %v36 = vrot.slane %v24, 7
  %v37 = vrot.slane %v25, 7
  %v38 = vlaneseq
  %v39 = vshrl.u32 %v38, 7
  %vm40 = vcmp.lt.s32.totalorder %v39, 1
  %v41 = vsel %vm40, %v36, %v37
  %v42 = vsel %vm40, %v35, %v36
  %v43 = vsel %vm40, %v37, %v35
  %v44 = vmul.f32 %v23, 2.0
  %v45 = vmul.f32 %v24, 2.0
  %v46 = vmul.f32 %v25, 2.0
  %v47 = vadd.f32 %v43, %v44
  %v48 = vadd.f32 %v42, %v45
  %v49 = vadd.f32 %v41, %v46
  %v50 = vrot.slane %v23, 1
  %v51 = vrot.slane %v24, 1
  %v52 = vrot.slane %v25, 1
  %vm53 = vcmp.lt.s32.totalorder %v39, 7
  %v54 = vsel %vm53, %v51, %v52
  %v55 = vsel %vm53, %v50, %v51
  %v56 = vsel %vm53, %v52, %v50
  %v57 = vadd.f32 %v47, %v55
  %v58 = vadd.f32 %v48, %v54
  %v59 = vadd.f32 %v49, %v56
  %v60 = vrot.slane %v32, 7
  %v61 = vrot.slane %v33, 7
  %v62 = vrot.slane %v34, 7
  %v63 = vsel %vm40, %v61, %v62
  %v64 = vsel %vm40, %v60, %v61
  %v65 = vsel %vm40, %v62, %v60
  %v66 = vrot.slane %v32, 1
  %v67 = vrot.slane %v33, 1
  %v68 = vrot.slane %v34, 1
  %v69 = vsel %vm53, %v67, %v68
  %v70 = vsel %vm53, %v66, %v67
  %v71 = vsel %vm53, %v68, %v66
  %v72 = vsub.f32 %v65, %v70
  %v73 = vsub.f32 %v64, %v69
  %v74 = vsub.f32 %v63, %v71
  %v75 = vand.u32 2147483647, %v57
  %v76 = vand.u32 2147483647, %v58
  %v77 = vand.u32 2147483647, %v59
  %v78 = vand.u32 2147483647, %v72
  %v79 = vand.u32 2147483647, %v73
  %v80 = vand.u32 2147483647, %v74
  %v81 = vadd.f32 %v75, %v78
  %v82 = vadd.f32 %v76, %v79
  %v83 = vadd.f32 %v77, %v80
  %84 = vst [vmem:[%s1] sm:$0xff] %v81
  %85 = vst [vmem:[%s1 + $0x8] sm:$0xff] %v82
  %86 = vst [vmem:[%s1 + $0x10] sm:$0xff] %v83
  %s87 = scalar_lea.vmem %s0, 24
  %v88 = vld [vmem:[%s87] sm:$0xff]
  %v89 = vld [vmem:[%s87 + $0x8] sm:$0xff]
  %v90 = vld [vmem:[%s87 + $0x10] sm:$0xff]
  %91 = vrot.lane.b32.xlu0 %v88, 1
  %v92 = vpop.permute.xlu0 %91
  %93 = vrot.lane.b32.xlu0 %v89, 1
  %v94 = vpop.permute.xlu0 %93
  %95 = vrot.lane.b32.xlu0 %v90, 1
  %v96 = vpop.permute.xlu0 %95
  %97 = vrot.lane.b32.xlu0 %v88, 127
  %v98 = vpop.permute.xlu0 %97
  %99 = vrot.lane.b32.xlu0 %v89, 127
  %v100 = vpop.permute.xlu0 %99
  %101 = vrot.lane.b32.xlu0 %v90, 127
  %v102 = vpop.permute.xlu0 %101
  %v103 = vsub.f32 %v98, %v92
  %v104 = vsub.f32 %v100, %v94
  %v105 = vsub.f32 %v102, %v96
  %v106 = vmul.f32 %v88, 2.0
  %v107 = vmul.f32 %v89, 2.0
  %v108 = vmul.f32 %v90, 2.0
  %v109 = vadd.f32 %v92, %v106
  %v110 = vadd.f32 %v94, %v107
  %v111 = vadd.f32 %v96, %v108
  %v112 = vadd.f32 %v109, %v98
  %v113 = vadd.f32 %v110, %v100
  %v114 = vadd.f32 %v111, %v102
  %v115 = vrot.slane %v103, 7
  %v116 = vrot.slane %v104, 7
  %v117 = vrot.slane %v105, 7
  %v118 = vsel %vm40, %v116, %v117
  %v119 = vsel %vm40, %v115, %v116
  %v120 = vsel %vm40, %v117, %v115
  %v121 = vmul.f32 %v103, 2.0
  %v122 = vmul.f32 %v104, 2.0
  %v123 = vmul.f32 %v105, 2.0
  %v124 = vadd.f32 %v120, %v121
  %v125 = vadd.f32 %v119, %v122
  %v126 = vadd.f32 %v118, %v123
  %v127 = vrot.slane %v103, 1
  %v128 = vrot.slane %v104, 1
  %v129 = vrot.slane %v105, 1
  %v130 = vsel %vm53, %v128, %v129
  %v131 = vsel %vm53, %v127, %v128
  %v132 = vsel %vm53, %v129, %v127
  %v133 = vadd.f32 %v124, %v131
  %v134 = vadd.f32 %v125, %v130
  %v135 = vadd.f32 %v126, %v132
  %v136 = vrot.slane %v112, 7
  %v137 = vrot.slane %v113, 7
  %v138 = vrot.slane %v114, 7
  %v139 = vsel %vm40, %v137, %v138
  %v140 = vsel %vm40, %v136, %v137
  %v141 = vsel %vm40, %v138, %v136
  %v142 = vrot.slane %v112, 1
  %v143 = vrot.slane %v113, 1
  %v144 = vrot.slane %v114, 1
  %v145 = vsel %vm53, %v143, %v144
  %v146 = vsel %vm53, %v142, %v143
  %v147 = vsel %vm53, %v144, %v142
  %v148 = vsub.f32 %v141, %v146
  %v149 = vsub.f32 %v140, %v145
  %v150 = vsub.f32 %v139, %v147
  %v151 = vand.u32 2147483647, %v133
  %v152 = vand.u32 2147483647, %v134
  %v153 = vand.u32 2147483647, %v135
  %v154 = vand.u32 2147483647, %v148
  %v155 = vand.u32 2147483647, %v149
  %v156 = vand.u32 2147483647, %v150
  %v157 = vadd.f32 %v151, %v154
  %v158 = vadd.f32 %v152, %v155
  %v159 = vadd.f32 %v153, %v156
  %s160 = scalar_lea.vmem %s1, 24
  %161 = vst [vmem:[%s160] sm:$0xff] %v157
  %162 = vst [vmem:[%s160 + $0x8] sm:$0xff] %v158
  %163 = vst [vmem:[%s160 + $0x10] sm:$0xff] %v159
  // Predicated region
  $region6: #{sobelxy.1} parent=0 // pred_check
    _
  $region7: #{sobelxy.1} parent=0 // pred_check_branch
    %165 = sbr.rel (0) target = $region9
  $region8: #{sobelxy.1} parent=0 // pred_region
    _
  $region9: #{sobelxy.1} parent=0 // pred_fallthru
    _
  // Predicated region
  $region10: #{sobelxy.1} parent=0 // pred_check
    _
  $region11: #{sobelxy.1} parent=0 // pred_check_branch
    %167 = sbr.rel (0) target = $region13
  $region12: #{sobelxy.1} parent=0 // pred_region
    _
  $region13: #{sobelxy.1} parent=0 // pred_fallthru
    _

</llo_original>
